<compile_context>
chip_gen: v7x
topology: tpu7x:2x2x1
jax: 0.10.0
libtpu: 0.0.40
codegen_flags: <defaults>
</compile_context>

<pallas_src>
import functools

import jax
import jax.numpy as jnp
from jax.experimental import pallas as pl
from jax.experimental.pallas import tpu as pltpu

block_size = 8
n_embd = 32


def head_kernel(x_ref, w_ref, o_ref):
    """One batch element of causal single-head attention.

    x_ref: (1, T, C)      one batch row (compute dtype, f32 or bf16)
    w_ref: (C, 3*Hp)      fused [K | Q | V] projection, lane-padded to Hp=128
                          per sub-block; scale already folded into Q columns.
    o_ref: (1, T, Hp)     lane-dense output (sliced back to Hs in the wrapper)
    """
    x = x_ref[0]                      # (T, C)
    w = w_ref[...]                    # (C, 3*Hp)
    T = x.shape[0]
    hp = w.shape[-1] // 3             # padded head size (128-aligned)

    # Fused QKV projection: one MXU pass, f32 accumulation.
    qkv = jnp.dot(x, w, preferred_element_type=jnp.float32)       # (T, 3*Hp)
    k = qkv[:, :hp]                   # 128-lane-aligned slices
    q = qkv[:, hp:2 * hp]             # hs**-0.5 already baked into weights
    v = qkv[:, 2 * hp:]

    # q @ k^T without materializing a transpose: contract the last dims.
    # Padded columns are zero in both operands -> contribute nothing.
    scores = jax.lax.dot_general(
        q.astype(x.dtype), k.astype(x.dtype),
        dimension_numbers=(((1,), (1,)), ((), ())),
        preferred_element_type=jnp.float32)                       # (T, T)

    # Static causal mask.  -inf is safe here: the diagonal is always
    # unmasked, so no row is fully masked (no exp(-inf - -inf) NaN).
    row = jax.lax.broadcasted_iota(jnp.int32, (T, T), 0)
    col = jax.lax.broadcasted_iota(jnp.int32, (T, T), 1)
    scores = jnp.where(row >= col, scores, -jnp.inf)

    # Exact softmax in f32 (no approx reciprocal: parity over EUP filler at
    # these sizes).
    scores = scores - jnp.max(scores, axis=-1, keepdims=True)
    p = jnp.exp(scores)
    p = p / jnp.sum(p, axis=-1, keepdims=True)

    out = jnp.dot(p.astype(x.dtype), v.astype(x.dtype),
                  preferred_element_type=jnp.float32)              # (T, Hp)
    o_ref[0] = out.astype(o_ref.dtype)


def head_forward(x, w_key, w_query, w_value, *, compute_dtype=jnp.float32):
    """x: (B, T, C); w_*: (head_size, n_embd) laid out like nn.Linear.weight.

    compute_dtype=jnp.bfloat16 selects the MXU-native-input path
    (f32 accumulation is kept via preferred_element_type).
    """
    B, T, C = x.shape
    Hs = w_key.shape[0]
    Hp = max(128, ((Hs + 127) // 128) * 128)      # lane-dense padded head dim
    out_dtype = x.dtype

    # One-time weight prep (fused into the jit): (out,in) -> (in,out), fold
    # the attention scale into the query columns, pad each block to Hp lanes,
    # concatenate K|Q|V, and cast once at the producer.
    def prep(w, scale=1.0):
        wt = (w.astype(jnp.float32) * scale).T                     # (C, Hs)
        return jnp.pad(wt, ((0, 0), (0, Hp - Hs))).astype(compute_dtype)

    w_qkv = jnp.concatenate(
        [prep(w_key), prep(w_query, Hs ** -0.5), prep(w_value)],
        axis=1)                                                    # (C, 3*Hp)
    xin = x.astype(compute_dtype)

    out = pl.pallas_call(
        head_kernel,
        out_shape=jax.ShapeDtypeStruct((B, T, Hp), out_dtype),
        grid=(B,),
        in_specs=[
            pl.BlockSpec((1, T, C), lambda b: (b, 0, 0)),
            # Constant index map: the fused weight stays VMEM-resident
            # across grid steps instead of being re-DMA'd.
            pl.BlockSpec((C, 3 * Hp), lambda b: (0, 0)),
        ],
        out_specs=pl.BlockSpec((1, T, Hp), lambda b: (b, 0, 0)),
        compiler_params=pltpu.CompilerParams(
            dimension_semantics=("parallel",)),
    )(xin, w_qkv)
    return out[:, :, :Hs]


def reference_forward(x, w_key, w_query, w_value):
    """Pure-JAX reference mirroring the PyTorch module."""
    k = x @ w_key.T
    q = x @ w_query.T
    v = x @ w_value.T
    wei = q @ jnp.swapaxes(k, -2, -1) * (k.shape[-1] ** -0.5)
    T = x.shape[1]
    tril = jnp.tril(jnp.ones((T, T)))
    wei = jnp.where(tril == 0, -jnp.inf, wei)
    wei = jax.nn.softmax(wei, axis=-1)
    return wei @ v


if __name__ == "__main__":
    head_size = 16
    B, T, C = 2, block_size, n_embd

    key = jax.random.PRNGKey(0)
    kx, kk, kq, kv = jax.random.split(key, 4)

    x = jax.random.normal(kx, (B, T, C), dtype=jnp.float32)
    # Deterministic params, shapes match nn.Linear(n_embd, head_size).weight.
    bound = 1.0 / (n_embd ** 0.5)
    w_key = jax.random.uniform(kk, (head_size, n_embd), jnp.float32, -bound, bound)
    w_query = jax.random.uniform(kq, (head_size, n_embd), jnp.float32, -bound, bound)
    w_value = jax.random.uniform(kv, (head_size, n_embd), jnp.float32, -bound, bound)

    ref = reference_forward(x, w_key, w_query, w_value)

    # f32 path: exact parity with the reference (no approx reciprocal).
    fwd_f32 = jax.jit(functools.partial(head_forward, compute_dtype=jnp.float32))
    out = jax.block_until_ready(fwd_f32(x, w_key, w_query, w_value))
    assert out.shape == (B, T, head_size)
    assert jnp.allclose(out, ref, atol=1e-4, rtol=1e-4), \
        f"f32 max abs err = {float(jnp.max(jnp.abs(out - ref)))}"

    # bf16 MXU-input path (production setting per perf review).
    fwd_bf16 = jax.jit(functools.partial(head_forward, compute_dtype=jnp.bfloat16))
    out_bf16 = jax.block_until_ready(fwd_bf16(x, w_key, w_query, w_value))
    assert out_bf16.shape == (B, T, head_size)
    assert jnp.allclose(out_bf16, ref, atol=3e-2, rtol=3e-2), \
        f"bf16 max abs err = {float(jnp.max(jnp.abs(out_bf16 - ref)))}"

    print("KERNEL_OK")
</pallas_src>

<mosaic_0001>
module attributes {stable_mosaic.version = 11 : i64} {
  func.func @head_kernel(%arg0: i32, %arg1: memref<1x8x32xf32, #tpu.memory_space<vmem>>, %arg2: memref<32x384xf32, #tpu.memory_space<vmem>>, %arg3: memref<1x8x128xf32, #tpu.memory_space<vmem>>) attributes {dimension_semantics = [#tpu.dimension_semantics<parallel>], iteration_bounds = array<i64: 2>, scalar_prefetch = 0 : i64, scratch_operands = 0 : i64, tpu.core_type = #tpu.core_type<tc>, window_params = [{transform_indices = @transform_0, window_bounds = array<i64: 1, 8, 32>}, {pipeline_mode = #tpu.pipeline_mode<synchronous>, transform_indices = @transform_1, window_bounds = array<i64: 32, 384>}, {transform_indices = @transform_2, window_bounds = array<i64: 1, 8, 128>}]} {
    %c0 = arith.constant 0 : index
    %c0_0 = arith.constant 0 : index
    %c0_1 = arith.constant 0 : index
    %0 = vector.load %arg1[%c0, %c0_0, %c0_1] : memref<1x8x32xf32, #tpu.memory_space<vmem>>, vector<1x8x32xf32>
    %1 = vector.shape_cast %0 : vector<1x8x32xf32> to vector<8x32xf32>
    %c0_2 = arith.constant 0 : index
    %c0_3 = arith.constant 0 : index
    %2 = vector.load %arg2[%c0_2, %c0_3] : memref<32x384xf32, #tpu.memory_space<vmem>>, vector<32x384xf32>
    %cst = arith.constant dense<0.000000e+00> : vector<8x384xf32>
    %3 = tpu.matmul %1, %2, %cst {dimension_numbers = #tpu.dot_dimension_numbers<[1], [0], [0], [1], [0, 0, 1, 1], [], []>} : vector<8x32xf32>, vector<32x384xf32>, vector<8x384xf32> -> vector<8x384xf32>
    %4 = vector.extract_strided_slice %3 {offsets = [0, 0], sizes = [8, 128], strides = [1, 1]} : vector<8x384xf32> to vector<8x128xf32>
    %5 = vector.extract_strided_slice %3 {offsets = [0, 128], sizes = [8, 128], strides = [1, 1]} : vector<8x384xf32> to vector<8x128xf32>
    %6 = vector.extract_strided_slice %3 {offsets = [0, 256], sizes = [8, 128], strides = [1, 1]} : vector<8x384xf32> to vector<8x128xf32>
    %cst_4 = arith.constant dense<0.000000e+00> : vector<8x8xf32>
    %7 = tpu.matmul %5, %4, %cst_4 {dimension_numbers = #tpu.dot_dimension_numbers<[1], [1], [0], [0], [0, 0, 1, 0], [], []>} : vector<8x128xf32>, vector<8x128xf32>, vector<8x8xf32> -> vector<8x8xf32>
    %8 = tpu.iota {dimensions = array<i32: 0>} : vector<8x8xi32>
    %9 = tpu.iota {dimensions = array<i32: 1>} : vector<8x8xi32>
    %10 = arith.cmpi sge, %8, %9 : vector<8x8xi32>
    %cst_5 = arith.constant 0xFF800000 : f32
    %11 = vector.broadcast %cst_5 : f32 to vector<8x8xf32>
    %12 = arith.select %10, %7, %11 : vector<8x8xi1>, vector<8x8xf32>
    %cst_6 = arith.constant dense<0xFF800000> : vector<8xf32>
    %13 = vector.multi_reduction <maximumf>, %12, %cst_6 [1] : vector<8x8xf32> to vector<8xf32>
    %14 = vector.shape_cast %13 : vector<8xf32> to vector<8x1xf32>
    %15 = vector.broadcast %14 : vector<8x1xf32> to vector<8x8xf32>
    %16 = arith.subf %12, %15 : vector<8x8xf32>
    %17 = math.exp %16 : vector<8x8xf32>
    %cst_7 = arith.constant dense<0.000000e+00> : vector<8xf32>
    %18 = vector.multi_reduction <add>, %17, %cst_7 [1] : vector<8x8xf32> to vector<8xf32>
    %19 = vector.shape_cast %18 : vector<8xf32> to vector<8x1xf32>
    %20 = vector.broadcast %19 : vector<8x1xf32> to vector<8x8xf32>
    %21 = arith.divf %17, %20 : vector<8x8xf32>
    %cst_8 = arith.constant dense<0.000000e+00> : vector<8x128xf32>
    %22 = tpu.matmul %21, %6, %cst_8 {dimension_numbers = #tpu.dot_dimension_numbers<[1], [0], [0], [1], [0, 0, 1, 1], [], []>} : vector<8x8xf32>, vector<8x128xf32>, vector<8x128xf32> -> vector<8x128xf32>
    %c0_9 = arith.constant 0 : index
    %c0_10 = arith.constant 0 : index
    %c0_11 = arith.constant 0 : index
    %23 = vector.load %arg3[%c0_9, %c0_10, %c0_11] : memref<1x8x128xf32, #tpu.memory_space<vmem>>, vector<1x8x128xf32>
    %24 = vector.shape_cast %23 : vector<1x8x128xf32> to vector<8x128xf32>
    %25 = vector.shape_cast %22 : vector<8x128xf32> to vector<1x8x128xf32>
    tpu.vector_store %arg3[%c0_9, %c0_10, %c0_11], %25 {strides = array<i32>} : memref<1x8x128xf32, #tpu.memory_space<vmem>>, vector<1x8x128xf32>,
    return
  }
  func.func @transform_0(%arg0: i32) -> (i32, i32, i32) {
    %c0_i32 = arith.constant 0 : i32
    %c0_i32_0 = arith.constant 0 : i32
    %c0_i32_1 = arith.constant 0 : i32
    return %arg0, %c0_i32, %c0_i32_0 : i32, i32, i32
  }
  func.func @transform_1(%arg0: i32) -> (i32, i32) {
    %c0_i32 = arith.constant 0 : i32
    %c0_i32_0 = arith.constant 0 : i32
    %c0_i32_1 = arith.constant 0 : i32
    return %c0_i32, %c0_i32_0 : i32, i32
  }
  func.func @transform_2(%arg0: i32) -> (i32, i32, i32) {
    %c0_i32 = arith.constant 0 : i32
    %c0_i32_0 = arith.constant 0 : i32
    %c0_i32_1 = arith.constant 0 : i32
    return %arg0, %c0_i32, %c0_i32_0 : i32, i32, i32
  }
}

</mosaic_0001>

<llo_original>
// kernel: head_forward.1
$region0: #{head_forward.1}
  #allocation0 [shape = 'u32[]', space=smem, size = 0x4, offset = 0x4, fixed_abs, tag = 'smem constant byte address 0x4 - core index']
  #allocation1 [shape = 'u32[144,128]{1,0:T(1,128)}', space=vmem, size = 0x12000, scoped, tag = 'internal scratch']
  %s0 = inlined_call_operand.vmem [shape: f32[2,8,32], index: 0, kind: input, shape index: {}]
  %s1 = inlined_call_operand.vmem [shape: f32[32,384], index: 1, kind: input, shape index: {}]
  %s2 = inlined_call_operand.hbm [shape: f32[2,8,128], index: 2, kind: output, shape index: {}]
  %s3 = sld [smem:[#allocation0]]
  $region41: #{head_forward.1} parent=0
    _
  %s5 = ssub.s32 1, %s3
  %s6 = scalar_select 0, %s5, %s3
  $region1: #{head_forward.1} parent=0
    #allocation2 [shape = 'u8[8192]{0}', space=vmem, size = 0x2000, scoped, tag = 'output window, operand 0']
    #allocation3 [shape = 's32[2]{0}', space=sflag, size = 0x8, scoped, tag = 'scoped memory for head_forward.1']
    %7 = vsyncpa [#allocation3], 0
    %s8 = scalar_lea.sflag [#allocation3], 1
    %9 = vsyncpa %s8, 0
    loop: start=0, step=1, limit=4
    $region2: #{head_forward.1} parent=1 // loop_pre_header
      _
    $region3: #{head_forward.1} parent=1 // loop_header
      %s11 = sphi 0, %s15
      %p12 = scmp.ge.s32.totalorder %s11, 4
      %s21 = sphi 0, %s23
      %s24 = sphi 0, %s21
      %s25 = sphi 0, %s24
      %s41 = sphi 0, %s25
      %s45 = sphi 0, %s45
      %s47 = sphi 0, %s45
      %s48 = sphi 0, %s47
      %s62 = sphi 0, %s48
      %s68 = sphi 0, %s70
      %s71 = sphi 0, %s68
      %s72 = sphi 0, %s71
      %s88 = sphi 0, %s72
    $region4: #{head_forward.1} parent=1 // loop_header_branch
      %14 = sbr.rel (%p12) target = $region8
    $region5: #{head_forward.1} parent=1 // loop_body
      %s16 = ssub.s32 %s11, 1
      %s17 = ssub.s32 %s11, 2
      %s18 = sadd.s32 %s11, 1
      %s19 = ssub.s32 %s11, %s18
      %p20 = scmp.eq.s32.totalorder %s19, 0
      %s22 = sadd.s32 %s21, 1
      %s23 = scalar_select %p20, %s21, %s22
      %p26 = pneg %p20
      %p27 = scmp.eq.s32.totalorder %s11, 1
      %p28 = por %p26, %p27
      %p29 = scmp.ne.s32.totalorder %s21, %s24
      %p30 = scmp.eq.s32.totalorder %s11, 0
      %p31 = por %p29, %p30
      %p32 = scmp.ne.s32.totalorder %s21, %s24
      %p33 = scmp.eq.s32.totalorder %s16, 1
      %p34 = por %p32, %p33
      %p35 = scmp.ne.s32.totalorder %s24, %s25
      %p36 = scmp.eq.s32.totalorder %s16, 0
      %p37 = por %p35, %p36
      %p38 = scmp.ne.s32.totalorder %s24, %s25
      %p39 = scmp.eq.s32.totalorder %s17, 1
      %p40 = por %p38, %p39
      %p42 = scmp.ne.s32.totalorder %s25, %s41
      %p43 = scmp.eq.s32.totalorder %s17, 0
      %p44 = por %p42, %p43
      %s46 = sadd.s32 %s45, 1
      %p49 = scmp.eq.s32.totalorder %s11, 1
      %p50 = scmp.ne.s32.totalorder %s45, %s47
      %p51 = scmp.eq.s32.totalorder %s11, 0
      %p52 = por %p50, %p51
      %p53 = scmp.ne.s32.totalorder %s45, %s47
      %p54 = scmp.eq.s32.totalorder %s16, 1
      %p55 = por %p53, %p54
      %p56 = scmp.ne.s32.totalorder %s47, %s48
      %p57 = scmp.eq.s32.totalorder %s16, 0
      %p58 = por %p56, %p57
      %p59 = scmp.ne.s32.totalorder %s47, %s48
      %p60 = scmp.eq.s32.totalorder %s17, 1
      %p61 = por %p59, %p60
      %p63 = scmp.ne.s32.totalorder %s48, %s62
      %p64 = scmp.eq.s32.totalorder %s17, 0
      %p65 = por %p63, %p64
      %s66 = ssub.s32 %s11, %s18
      %p67 = scmp.eq.s32.totalorder %s66, 0
      %s69 = sadd.s32 %s68, 1
      %s70 = scalar_select %p67, %s68, %s69
      %p73 = pneg %p67
      %p74 = scmp.eq.s32.totalorder %s11, 1
      %p75 = por %p73, %p74
      %p76 = scmp.ne.s32.totalorder %s68, %s71
      %p77 = scmp.eq.s32.totalorder %s11, 0
      %p78 = por %p76, %p77
      %p79 = scmp.ne.s32.totalorder %s68, %s71
      %p80 = scmp.eq.s32.totalorder %s16, 1
      %p81 = por %p79, %p80
      %p82 = scmp.ne.s32.totalorder %s71, %s72
      %p83 = scmp.eq.s32.totalorder %s16, 0
      %p84 = por %p82, %p83
      %p85 = scmp.ne.s32.totalorder %s71, %s72
      %p86 = scmp.eq.s32.totalorder %s17, 1
      %p87 = por %p85, %p86
      %p89 = scmp.ne.s32.totalorder %s72, %s88
      %p90 = scmp.eq.s32.totalorder %s17, 0
      %p91 = por %p89, %p90
      %p92 = scmp.le.s32.totalorder 1, %s11
      %p93 = scmp.lt.s32.totalorder %s11, 3
      %p94 = pnand %p92, %p93
      %p95 = pneg %p94
      // Predicated region
      $region9: #{head_forward.1} parent=5 // pred_check
        _
      $region10: #{head_forward.1} parent=5 // pred_check_branch
        %97 = sbr.rel (%p94) target = $region12
      $region11: #{head_forward.1} parent=5 // pred_region
        %s98 = ssub.s32 %s11, 1
        // Predicated region
        $region13: #{head_forward.1} parent=11 // pred_check
          %p99 = pneg %p58
        $region14: #{head_forward.1} parent=11 // pred_check_branch
          %101 = sbr.rel (%p99) target = $region16
        $region15: #{head_forward.1} parent=11 // pred_region
          _
        $region16: #{head_forward.1} parent=11 // pred_fallthru
          _
      $region12: #{head_forward.1} parent=5 // pred_fallthru
        _
      %p102 = scmp.lt.s32.totalorder %s11, 2
      // Predicated region
      $region17: #{head_forward.1} parent=5 // pred_check
        %p103 = pneg %p102
      $region18: #{head_forward.1} parent=5 // pred_check_branch
        %105 = sbr.rel (%p103) target = $region20
      $region19: #{head_forward.1} parent=5 // pred_region
        // Predicated region
        $region21: #{head_forward.1} parent=19 // pred_check
          %p106 = pneg %p31
        $region22: #{head_forward.1} parent=19 // pred_check_branch
          %108 = sbr.rel (%p106) target = $region24
        $region23: #{head_forward.1} parent=19 // pred_region
          %p109 = scmp.lt.s32.totalorder %s11, 1
          %s110 = scalar_select %p109, %s11, 1
          %s111 = smul.addr %s110, 8
          %s112 = scalar_lea.vmem %s0, %s111
        $region24: #{head_forward.1} parent=19 // pred_fallthru
          _
      $region20: #{head_forward.1} parent=5 // pred_fallthru
        _
      %p113 = scmp.le.s32.totalorder 1, %s11
      %p114 = scmp.lt.s32.totalorder %s11, 3
      %p115 = pnand %p113, %p114
      %p116 = pneg %p115
      // Predicated region
      $region25: #{head_forward.1} parent=5 // pred_check
        _
      $region26: #{head_forward.1} parent=5 // pred_check_branch
        %118 = sbr.rel (%p115) target = $region28
      $region27: #{head_forward.1} parent=5 // pred_region
        %s119 = ssub.s32 %s11, 1
        %p120 = scmp.lt.s32.totalorder %s16, 1
        %s121 = scalar_select %p120, %s16, 1
        %s122 = smul.addr %s121, 8
        %s123 = scalar_lea.vmem %s0, %s122
        %p124 = pneg %p37
        %p125 = pneg %p34
        %p126 = pneg %p58
        %p127 = pneg %p55
        %p128 = pneg %p84
        %p129 = pneg %p81
        %s130 = sand.u32 %s71, 1
        %s131 = scalar_lea.sflag [#allocation3], %s130
        %s132 = sand.u32 %s71, 1
        %s133 = smul.addr %s132, 8
        %s134 = scalar_lea.vmem [#allocation2], %s133
        %p135 = scmp.lt.s32.totalorder %s16, 1
        %s136 = scalar_select %p135, %s16, 1
        %s137 = smul.addr %s136, 8
        %s138 = scalar_lea.vmem %s0, %s137
        %v139 = vld [vmem:[%s138] sm:$0xff]
        %v140 = vld [vmem:[%s1] sm:$0xff]
        %v141 = vld [vmem:[%s1 + $0x8] sm:$0xff]
        %v142 = vld [vmem:[%s1 + $0x10] sm:$0xff]
        %v143 = vld [vmem:[%s1 + $0x18] sm:$0xff]
        %v144 = vld [vmem:[%s1 + $0x20] sm:$0xff]
        %v145 = vld [vmem:[%s1 + $0x28] sm:$0xff]
        %v146 = vld [vmem:[%s1 + $0x30] sm:$0xff]
        %v147 = vld [vmem:[%s1 + $0x38] sm:$0xff]
        %v148 = vld [vmem:[%s1 + $0x40] sm:$0xff]
        %v149 = vld [vmem:[%s1 + $0x48] sm:$0xff]
        %v150 = vld [vmem:[%s1 + $0x50] sm:$0xff]
        %v151 = vld [vmem:[%s1 + $0x58] sm:$0xff]
        %vm152 = vcmask 261120
        %v154 = vsel %vm152, %v139, 0
        %156 = vmatprep.subr.mxu0 %v141
        %157 = vmatpush1.msra.mxu0 %v140
        %158 = vmatprep.subr.mxu0 %v144
        %159 = vmatpush1.msra.mxu0 %v143
        %160 = vmatprep.subr.mxu0 %v147
        %161 = vmatpush1.msra.mxu0 %v146
        %162 = vmatprep.subr.mxu0 %v150
        %163 = vmatpush1.msra.mxu0 %v149
        %164 = vmatprep.subr.mxu0 0.0
        %165 = vmatpush1.msra.mxu0 0.0
        %166 = vmatprep.subr.mxu0 0.0
        %167 = vmatpush1.msra.mxu0 0.0
        %168 = vmatprep.subr.mxu0 0.0
        %169 = vmatpush1.msra.mxu0 0.0
        %170 = vmatprep.subr.mxu0 0.0
        %171 = vmatpush1.msra.mxu0 0.0
        %172 = vmatprep.subr.mxu0 0.0
        %173 = vmatpush1.msra.mxu0 0.0
        %174 = vmatprep.subr.mxu0 0.0
        %175 = vmatpush1.msra.mxu0 0.0
        %176 = vmatprep.subr.mxu0 0.0
        %177 = vmatpush1.msra.mxu0 0.0
        %178 = vmatprep.subr.mxu0 0.0
        %179 = vmatpush1.msra.mxu0 0.0
        %180 = vmatprep.subr.mxu0 0.0
        %181 = vmatpush1.msra.mxu0 0.0
        %182 = vmatprep.subr.mxu0 0.0
        %183 = vmatpush1.msra.mxu0 0.0
        %184 = vmatprep.subr.mxu0 0.0
        %185 = vmatpush1.msra.mxu0 0.0
        %186 = vmatprep.subr.mxu0 0.0
        %187 = vmatpush1.msra.mxu0 0.0
        %188 = vmatprep.subr.mxu0 0.0
        %189 = vmatpush1.msra.mxu0 0.0
        %190 = vmatprep.subr.mxu0 0.0
        %191 = vmatpush1.msra.mxu0 0.0
        %192 = vmatprep.subr.mxu0 0.0
        %193 = vmatpush1.msra.mxu0 0.0
        %194 = vmatprep.subr.mxu0 0.0
        %195 = vmatpush1.msra.mxu0 0.0
        %196 = vmatprep.subr.mxu0 0.0
        %197 = vmatpush1.msra.mxu0 0.0
        %198 = vmatprep.subr.mxu0 0.0
        %199 = vmatpush1.msra.mxu0 0.0
        %200 = vmatprep.subr.mxu0 0.0
        %201 = vmatpush1.msra.mxu0 0.0
        %202 = vmatprep.subr.mxu0 0.0
        %203 = vmatpush1.msra.mxu0 0.0
        %204 = vmatprep.subr.mxu0 0.0
        %205 = vmatpush1.msra.mxu0 0.0
        %206 = vmatprep.subr.mxu0 0.0
        %207 = vmatpush1.msra.mxu0 0.0
        %208 = vmatprep.subr.mxu0 0.0
        %209 = vmatpush1.msra.mxu0 0.0
        %210 = vmatprep.subr.mxu0 0.0
        %211 = vmatpush1.msra.mxu0 0.0
        %212 = vmatprep.subr.mxu0 0.0
        %213 = vmatpush1.msra.mxu0 0.0
        %214 = vmatprep.subr.mxu0 0.0
        %215 = vmatpush1.msra.mxu0 0.0
        %216 = vmatprep.subr.mxu0 0.0
        %217 = vmatpush1.msra.mxu0 0.0
        %218 = vmatprep.subr.mxu0 0.0
        %219 = vmatpush1.msra.mxu0 0.0
        %220 = vmatprep.mubr.f32.mxu0 0.0
        %221 = vmatmul.mubr.f32.gmra.mrb[0].mxu0 %v154
        %v222 = vpop.f32.mrb[0].mxu0
        %v223 = vadd.f32 0.0, %v222
        %v224 = vpop.f32.mrb[0].mxu0
        %v225 = vadd.f32 0.0, %v224
        %226 = vdwg.mxu0
        %227 = vmatprep.subr.mxu0 0.0
        %228 = vmatpush1.msra.mxu0 %v142
        %229 = vmatprep.subr.mxu0 0.0
        %230 = vmatpush1.msra.mxu0 %v145
        %231 = vmatprep.subr.mxu0 0.0
        %232 = vmatpush1.msra.mxu0 %v148
        %233 = vmatprep.subr.mxu0 0.0
        %234 = vmatpush1.msra.mxu0 %v151
        %235 = vmatprep.subr.mxu0 0.0
        %236 = vmatpush1.msra.mxu0 0.0
        %237 = vmatprep.subr.mxu0 0.0
        %238 = vmatpush1.msra.mxu0 0.0
        %239 = vmatprep.subr.mxu0 0.0
        %240 = vmatpush1.msra.mxu0 0.0
        %241 = vmatprep.subr.mxu0 0.0
        %242 = vmatpush1.msra.mxu0 0.0
        %243 = vmatprep.subr.mxu0 0.0
        %244 = vmatpush1.msra.mxu0 0.0
        %245 = vmatprep.subr.mxu0 0.0
        %246 = vmatpush1.msra.mxu0 0.0
        %247 = vmatprep.subr.mxu0 0.0
        %248 = vmatpush1.msra.mxu0 0.0
        %249 = vmatprep.subr.mxu0 0.0
        %250 = vmatpush1.msra.mxu0 0.0
        %251 = vmatprep.subr.mxu0 0.0
        %252 = vmatpush1.msra.mxu0 0.0
        %253 = vmatprep.subr.mxu0 0.0
        %254 = vmatpush1.msra.mxu0 0.0
        %255 = vmatprep.subr.mxu0 0.0
        %256 = vmatpush1.msra.mxu0 0.0
        %257 = vmatprep.subr.mxu0 0.0
        %258 = vmatpush1.msra.mxu0 0.0
        %259 = vmatprep.subr.mxu0 0.0
        %260 = vmatpush1.msra.mxu0 0.0
        %261 = vmatprep.subr.mxu0 0.0
        %262 = vmatpush1.msra.mxu0 0.0
        %263 = vmatprep.subr.mxu0 0.0
        %264 = vmatpush1.msra.mxu0 0.0
        %265 = vmatprep.subr.mxu0 0.0
        %266 = vmatpush1.msra.mxu0 0.0
        %267 = vmatprep.subr.mxu0 0.0
        %268 = vmatpush1.msra.mxu0 0.0
        %269 = vmatprep.subr.mxu0 0.0
        %270 = vmatpush1.msra.mxu0 0.0
        %271 = vmatprep.subr.mxu0 0.0
        %272 = vmatpush1.msra.mxu0 0.0
        %273 = vmatprep.subr.mxu0 0.0
        %274 = vmatpush1.msra.mxu0 0.0
        %275 = vmatprep.subr.mxu0 0.0
        %276 = vmatpush1.msra.mxu0 0.0
        %277 = vmatprep.subr.mxu0 0.0
        %278 = vmatpush1.msra.mxu0 0.0
        %279 = vmatprep.subr.mxu0 0.0
        %280 = vmatpush1.msra.mxu0 0.0
        %281 = vmatprep.subr.mxu0 0.0
        %282 = vmatpush1.msra.mxu0 0.0
        %283 = vmatprep.subr.mxu0 0.0
        %284 = vmatpush1.msra.mxu0 0.0
        %285 = vmatprep.subr.mxu0 0.0
        %286 = vmatpush1.msra.mxu0 0.0
        %287 = vmatprep.subr.mxu0 0.0
        %288 = vmatpush1.msra.mxu0 0.0
        %289 = vmatprep.subr.mxu0 0.0
        %290 = vmatpush1.msra.mxu0 0.0
        %291 = vmatprep.mubr.f32.mxu0 0.0
        %292 = vmatmul.mubr.f32.gmra.mrb[0].mxu0 %v154
        %v293 = vpop.f32.mrb[0].mxu0
        %v294 = vadd.f32 0.0, %v293
        %v295 = vpop.f32.mrb[0].mxu0
        %296 = vdwg.mxu0
        %297 = vmatprep.subr.mxu0 0.0
        %298 = vmatpush1.xpose.msra.mxu0 %v223
        %299 = vmatprep.subr.mxu0 0.0
        %300 = vmatpush1.xpose.msra.mxu0 0.0
        %301 = vmatprep.subr.mxu0 0.0
        %302 = vmatpush1.xpose.msra.mxu0 0.0
        %303 = vmatprep.subr.mxu0 0.0
        %304 = vmatpush1.xpose.msra.mxu0 0.0
        %305 = vmatprep.subr.mxu0 0.0
        %306 = vmatpush1.xpose.msra.mxu0 0.0
        %307 = vmatprep.subr.mxu0 0.0
        %308 = vmatpush1.xpose.msra.mxu0 0.0
        %309 = vmatprep.subr.mxu0 0.0
        %310 = vmatpush1.xpose.msra.mxu0 0.0
        %311 = vmatprep.subr.mxu0 0.0
        %312 = vmatpush1.xpose.msra.mxu0 0.0
        %313 = vmatprep.subr.mxu0 0.0
        %314 = vmatpush1.xpose.msra.mxu0 0.0
        %315 = vmatprep.subr.mxu0 0.0
        %316 = vmatpush1.xpose.msra.mxu0 0.0
        %317 = vmatprep.subr.mxu0 0.0
        %318 = vmatpush1.xpose.msra.mxu0 0.0
        %319 = vmatprep.subr.mxu0 0.0
        %320 = vmatpush1.xpose.msra.mxu0 0.0
        %321 = vmatprep.subr.mxu0 0.0
        %322 = vmatpush1.xpose.msra.mxu0 0.0
        %323 = vmatprep.subr.mxu0 0.0
        %324 = vmatpush1.xpose.msra.mxu0 0.0
        %325 = vmatprep.subr.mxu0 0.0
        %326 = vmatpush1.xpose.msra.mxu0 0.0
        %327 = vmatprep.subr.mxu0 0.0
        %328 = vmatpush1.xpose.msra.mxu0 0.0
        %329 = vmatprep.subr.mxu0 0.0
        %330 = vmatpush1.xpose.msra.mxu0 0.0
        %331 = vmatprep.subr.mxu0 0.0
        %332 = vmatpush1.xpose.msra.mxu0 0.0
        %333 = vmatprep.subr.mxu0 0.0
        %334 = vmatpush1.xpose.msra.mxu0 0.0
        %335 = vmatprep.subr.mxu0 0.0
        %336 = vmatpush1.xpose.msra.mxu0 0.0
        %337 = vmatprep.subr.mxu0 0.0
        %338 = vmatpush1.xpose.msra.mxu0 0.0
        %339 = vmatprep.subr.mxu0 0.0
        %340 = vmatpush1.xpose.msra.mxu0 0.0
        %341 = vmatprep.subr.mxu0 0.0
        %342 = vmatpush1.xpose.msra.mxu0 0.0
        %343 = vmatprep.subr.mxu0 0.0
        %344 = vmatpush1.xpose.msra.mxu0 0.0
        %345 = vmatprep.subr.mxu0 0.0
        %346 = vmatpush1.xpose.msra.mxu0 0.0
        %347 = vmatprep.subr.mxu0 0.0
        %348 = vmatpush1.xpose.msra.mxu0 0.0
        %349 = vmatprep.subr.mxu0 0.0
        %350 = vmatpush1.xpose.msra.mxu0 0.0
        %351 = vmatprep.subr.mxu0 0.0
        %352 = vmatpush1.xpose.msra.mxu0 0.0
        %353 = vmatprep.subr.mxu0 0.0
        %354 = vmatpush1.xpose.msra.mxu0 0.0
        %355 = vmatprep.subr.mxu0 0.0
        %356 = vmatpush1.xpose.msra.mxu0 0.0
        %357 = vmatprep.subr.mxu0 0.0
        %358 = vmatpush1.xpose.msra.mxu0 0.0
        %359 = vmatprep.subr.mxu0 0.0
        %360 = vmatpush1.xpose.msra.mxu0 0.0
        %361 = vmatprep.mubr.f32.mxu0 0.0
        %362 = vmatmul.mubr.f32.gmra.mrb[0].mxu0 %v225
        %v363 = vpop.f32.mrb[0].mxu0
        %v364 = vadd.f32 0.0, %v363
        %v365 = vpop.f32.mrb[0].mxu0
        %366 = vdwg.mxu0
        %v367 = vlaneseq
        %v368 = vshrl.u32 %v367, 7
        %v369 = vlaneseq
        %v370 = vand.u32 %v369, 127
        %vm371 = vcmp.ge.s32.totalorder %v368, %v370
        %v372 = vsel %vm371, %v364, -inf
        %vm373 = vcmask 64512
        %v374 = vsel %vm373, %v372, -inf
        %375 = vmax.xlane.f32.xlu0 %v374
        %v376 = vpop.xlane.xlu0 %375
        %v377 = vsub.f32 %v372, %v376
        %v378 = vmul.f32 %v377, 1.442695
        %v379 = vpow.pop %v378
        %v380 = vsel %vm373, %v379, 0.0
        %381 = vadd.xlane.f32.xlu0 %v380
        %v382 = vpop.xlane.xlu0 %381
        %v383 = vrcp.pop %v382
        %v384 = vmul.f32 %v379, %v383
        %v386 = vsel %vm373, %v384, 0
        %388 = vmatprep.subr.mxu0 0.0
        %389 = vmatpush1.msra.mxu0 %v294
        %390 = vmatprep.subr.mxu0 0.0
        %391 = vmatpush1.msra.mxu0 0.0
        %392 = vmatprep.subr.mxu0 0.0
        %393 = vmatpush1.msra.mxu0 0.0
        %394 = vmatprep.subr.mxu0 0.0
        %395 = vmatpush1.msra.mxu0 0.0
        %396 = vmatprep.subr.mxu0 0.0
        %397 = vmatpush1.msra.mxu0 0.0
        %398 = vmatprep.subr.mxu0 0.0
        %399 = vmatpush1.msra.mxu0 0.0
        %400 = vmatprep.subr.mxu0 0.0
        %401 = vmatpush1.msra.mxu0 0.0
        %402 = vmatprep.subr.mxu0 0.0
        %403 = vmatpush1.msra.mxu0 0.0
        %404 = vmatprep.subr.mxu0 0.0
        %405 = vmatpush1.msra.mxu0 0.0
        %406 = vmatprep.subr.mxu0 0.0
        %407 = vmatpush1.msra.mxu0 0.0
        %408 = vmatprep.subr.mxu0 0.0
        %409 = vmatpush1.msra.mxu0 0.0
        %410 = vmatprep.subr.mxu0 0.0
        %411 = vmatpush1.msra.mxu0 0.0
        %412 = vmatprep.subr.mxu0 0.0
        %413 = vmatpush1.msra.mxu0 0.0
        %414 = vmatprep.subr.mxu0 0.0
        %415 = vmatpush1.msra.mxu0 0.0
        %416 = vmatprep.subr.mxu0 0.0
        %417 = vmatpush1.msra.mxu0 0.0
        %418 = vmatprep.subr.mxu0 0.0
        %419 = vmatpush1.msra.mxu0 0.0
        %420 = vmatprep.subr.mxu0 0.0
        %421 = vmatpush1.msra.mxu0 0.0
        %422 = vmatprep.subr.mxu0 0.0
        %423 = vmatpush1.msra.mxu0 0.0
        %424 = vmatprep.subr.mxu0 0.0
        %425 = vmatpush1.msra.mxu0 0.0
        %426 = vmatprep.subr.mxu0 0.0
        %427 = vmatpush1.msra.mxu0 0.0
        %428 = vmatprep.subr.mxu0 0.0
        %429 = vmatpush1.msra.mxu0 0.0
        %430 = vmatprep.subr.mxu0 0.0
        %431 = vmatpush1.msra.mxu0 0.0
        %432 = vmatprep.subr.mxu0 0.0
        %433 = vmatpush1.msra.mxu0 0.0
        %434 = vmatprep.subr.mxu0 0.0
        %435 = vmatpush1.msra.mxu0 0.0
        %436 = vmatprep.subr.mxu0 0.0
        %437 = vmatpush1.msra.mxu0 0.0
        %438 = vmatprep.subr.mxu0 0.0
        %439 = vmatpush1.msra.mxu0 0.0
        %440 = vmatprep.subr.mxu0 0.0
        %441 = vmatpush1.msra.mxu0 0.0
        %442 = vmatprep.subr.mxu0 0.0
        %443 = vmatpush1.msra.mxu0 0.0
        %444 = vmatprep.subr.mxu0 0.0
        %445 = vmatpush1.msra.mxu0 0.0
        %446 = vmatprep.subr.mxu0 0.0
        %447 = vmatpush1.msra.mxu0 0.0
        %448 = vmatprep.subr.mxu0 0.0
        %449 = vmatpush1.msra.mxu0 0.0
        %450 = vmatprep.subr.mxu0 0.0
        %451 = vmatpush1.msra.mxu0 0.0
        %452 = vmatprep.mubr.f32.mxu0 0.0
        %453 = vmatmul.mubr.f32.gmra.mrb[0].mxu0 %v386
        %v454 = vpop.f32.mrb[0].mxu0
        %v455 = vadd.f32 0.0, %v454
        %v456 = vpop.f32.mrb[0].mxu0
        %457 = vdwg.mxu0
        %458 = vst [vmem:[%s134] sm:$0xff] %v455
        %s459 = sand.u32 %s71, 1
        %s460 = scalar_lea.sflag [#allocation3], %s459
        %s461 = sand.u32 %s71, 1
        %s462 = smul.addr %s461, 8
        %s463 = scalar_lea.vmem [#allocation2], %s462
        // Predicated region
        $region29: #{head_forward.1} parent=27 // pred_check
          %p464 = pneg %p81
        $region30: #{head_forward.1} parent=27 // pred_check_branch
          %466 = sbr.rel (%p464) target = $region32
        $region31: #{head_forward.1} parent=27 // pred_region
          %s468 = ssub.s32 128, 128
          %469 = vsyncadd %s460, %s468
          %s470 = smul.addr %s16, 128
          %s471 = scalar_lea.hbm %s2, %s470
          %s473 = sshll.u32 %s463, 4
          %s474 = int_to_ptr.vmem [resolvable:$true] %s473
          %476 = dma.vmem_to_hbm [thread:$0]  %s474, 128, %s471, %s460
        $region32: #{head_forward.1} parent=27 // pred_fallthru
          _
      $region28: #{head_forward.1} parent=5 // pred_fallthru
        _
      %p477 = scmp.le.s32.totalorder 2, %s11
      // Predicated region
      $region33: #{head_forward.1} parent=5 // pred_check
        %p478 = pneg %p477
      $region34: #{head_forward.1} parent=5 // pred_check_branch
        %480 = sbr.rel (%p478) target = $region36
      $region35: #{head_forward.1} parent=5 // pred_region
        %s481 = ssub.s32 %s11, 2
        // Predicated region
        $region37: #{head_forward.1} parent=35 // pred_check
          %p482 = pneg %p87
        $region38: #{head_forward.1} parent=35 // pred_check_branch
          %484 = sbr.rel (%p482) target = $region40
        $region39: #{head_forward.1} parent=35 // pred_region
          %s485 = sand.u32 %s72, 1
          %s486 = scalar_lea.sflag [#allocation3], %s485
          %s487 = sand.u32 %s72, 1
          %s488 = smul.addr %s487, 8
          %s489 = scalar_lea.vmem [#allocation2], %s488
          %490 = dma.done %s486, 128
        $region40: #{head_forward.1} parent=35 // pred_fallthru
          _
      $region36: #{head_forward.1} parent=5 // pred_fallthru
        _
    $region6: #{head_forward.1} parent=1 // loop_footer
      %s15 = sadd.s32 1, %s11
    $region7: #{head_forward.1} parent=1 // loop_footer_branch
      %10 = sbr.rel target = $region3
    $region8: #{head_forward.1} parent=1 // loop_exit
      _
    %491 = vsyncpa [#allocation3], 1
    %s492 = scalar_lea.sflag [#allocation3], 1
    %493 = vsyncpa %s492, 1

</llo_original>
